<compile_context>
chip_gen: v7x
topology: tpu7x:2x2x1
jax: 0.10.0
libtpu: 0.0.40
codegen_flags: <defaults>
</compile_context>

<pallas_src>
import functools

import jax
import jax.numpy as jnp
from jax.experimental import pallas as pl
from jax.experimental.pallas import tpu as pltpu


def _round_up(x, m):
    return ((x + m - 1) // m) * m


def _encoder_kernel(x_ref, w1_ref, b1_ref, w2_ref, b2_ref, w3_ref, b3_ref,
                    out_ref):
    # bf16 MXU inputs, f32 accumulation, f32 epilogue (v5e VPU has no bf16).
    x = x_ref[...].astype(jnp.bfloat16)
    # Read biases once per grid step (hoisted; no per-op broadcast in a loop).
    b1 = b1_ref[...]
    b2 = b2_ref[...]
    b3 = b3_ref[...]
    # Layer 1: Linear + ReLU.
    h1 = jnp.dot(x, w1_ref[...].astype(jnp.bfloat16),
                 preferred_element_type=jnp.float32)
    h1 = jnp.maximum(h1 + b1, 0.0)
    # Layer 2: Linear + ReLU.
    h2 = jnp.dot(h1.astype(jnp.bfloat16), w2_ref[...].astype(jnp.bfloat16),
                 preferred_element_type=jnp.float32)
    h2 = jnp.maximum(h2 + b2, 0.0)
    # Layer 3: Linear -> single lane-dense output slab [tile, out_pad].
    h3 = jnp.dot(h2.astype(jnp.bfloat16), w3_ref[...].astype(jnp.bfloat16),
                 preferred_element_type=jnp.float32) + b3
    out_ref[...] = h3.astype(out_ref.dtype)


@functools.partial(jax.jit, static_argnames=("latent_dim", "block_batch"))
def encoder_forward(x, params, latent_dim, *, block_batch=1024):
    """Encoder forward pass as a Pallas TPU kernel.

    Args:
      x: [batch, data_dim] float32 (or bfloat16).
      params: dict with
        w1 [data_dim, hidden]  bf16, b1 [1, hidden]  f32,
        w2 [hidden, hidden]    bf16, b2 [1, hidden]  f32,
        w3 [hidden, out_pad]   bf16, b3 [1, out_pad] f32,
        where out_pad = round_up(2*latent_dim, 128) (zero-padded columns).
      latent_dim: int.
      block_batch: max rows per grid step (multiple of 8).

    Returns:
      (mu, log_var): each [batch, latent_dim] float32.
    """
    batch, data_dim = x.shape
    hidden = params["w1"].shape[1]
    out_pad = params["w3"].shape[1]           # lane-dense: multiple of 128
    assert out_pad % 128 == 0 and 2 * latent_dim <= out_pad

    # Batch tiling: >= 2 tiles when batch >= 16 so a "parallel" grid axis can
    # be split across v7x's two TensorCores; single full-array tile otherwise.
    if batch >= 16:
        tb = min(block_batch, _round_up(pl.cdiv(batch, 2), 8))
    else:
        tb = batch
    num_tiles = pl.cdiv(batch, tb)            # ragged last tile handled by Pallas

    wbytes = params["w1"].dtype.itemsize
    flops = 2 * batch * (data_dim * hidden + hidden * hidden + hidden * out_pad)
    bytes_accessed = (
        batch * data_dim * x.dtype.itemsize                              # x in
        + (data_dim * hidden + hidden * hidden + hidden * out_pad) * wbytes  # weights
        + (2 * hidden + out_pad) * 4                                     # biases
        + batch * out_pad * 4)                                           # h3 out
    cost = pl.CostEstimate(
        flops=flops, transcendentals=0, bytes_accessed=bytes_accessed)

    # VMEM-resident operands (constant index_map -> fetched once, kept live).
    resident = lambda shape: pl.BlockSpec(shape, lambda i: (0, 0))

    h3 = pl.pallas_call(
        _encoder_kernel,
        out_shape=jax.ShapeDtypeStruct((batch, out_pad), jnp.float32),
        grid=(num_tiles,),
        in_specs=[
            pl.BlockSpec((tb, data_dim), lambda i: (i, 0)),   # x: streamed rows
            resident(params["w1"].shape),
            resident(params["b1"].shape),
            resident(params["w2"].shape),
            resident(params["b2"].shape),
            resident(params["w3"].shape),
            resident(params["b3"].shape),
        ],
        out_specs=pl.BlockSpec((tb, out_pad), lambda i: (i, 0)),
        compiler_params=pltpu.CompilerParams(
            dimension_semantics=("parallel",),
            vmem_limit_bytes=48 * 1024 * 1024),
        cost_estimate=cost,
    )(x, params["w1"], params["b1"], params["w2"], params["b2"],
      params["w3"], params["b3"])

    # mu/log_var split (and dropping the zero pad columns) is a free XLA slice.
    mu = h3[:, :latent_dim]
    log_var = h3[:, latent_dim:2 * latent_dim]
    return mu, log_var


def init_encoder_params(key, data_dim, latent_dim, hidden_dim):
    """nn.Linear-like init, stored as [in, out]; w3/b3 zero-padded to 128 lanes.

    Weights are stored in bfloat16 (MXU-native), biases in float32 (f32
    epilogue).  Zero padding of the last layer's output columns is exact:
    padded columns are sliced away in the wrapper.
    """
    k1, k2, k3 = jax.random.split(key, 3)

    def lin(k, fan_in, fan_out):
        bound = 1.0 / (fan_in ** 0.5)
        kw, kb = jax.random.split(k)
        w = jax.random.uniform(kw, (fan_in, fan_out), jnp.float32, -bound, bound)
        b = jax.random.uniform(kb, (1, fan_out), jnp.float32, -bound, bound)
        return w, b

    w1, b1 = lin(k1, data_dim, hidden_dim)
    w2, b2 = lin(k2, hidden_dim, hidden_dim)
    w3, b3 = lin(k3, hidden_dim, 2 * latent_dim)

    out_pad = _round_up(2 * latent_dim, 128)
    pad = out_pad - 2 * latent_dim
    w3 = jnp.pad(w3, ((0, 0), (0, pad)))
    b3 = jnp.pad(b3, ((0, 0), (0, pad)))

    return {
        "w1": w1.astype(jnp.bfloat16), "b1": b1,
        "w2": w2.astype(jnp.bfloat16), "b2": b2,
        "w3": w3.astype(jnp.bfloat16), "b3": b3,
    }


def _reference(x, params, latent_dim):
    """Pure-JAX reference with the same numerics (bf16 dot inputs, f32 accum)."""
    f32 = jnp.float32
    h = jnp.maximum(
        jnp.dot(x.astype(jnp.bfloat16), params["w1"], preferred_element_type=f32)
        + params["b1"], 0.0)
    h = jnp.maximum(
        jnp.dot(h.astype(jnp.bfloat16), params["w2"], preferred_element_type=f32)
        + params["b2"], 0.0)
    h = (jnp.dot(h.astype(jnp.bfloat16), params["w3"], preferred_element_type=f32)
         + params["b3"])
    return h[:, :latent_dim], h[:, latent_dim:2 * latent_dim]


if __name__ == "__main__":
    # Small shapes consistent with the module's forward: x is [batch, data_dim].
    batch, data_dim, latent_dim, hidden_dim = 16, 16, 8, 32

    key = jax.random.PRNGKey(0)
    kx, kp, kx2 = jax.random.split(key, 3)
    x = jax.random.normal(kx, (batch, data_dim), jnp.float32)
    params = init_encoder_params(kp, data_dim, latent_dim, hidden_dim)

    # 1) Default path: batch=16 -> 2 tiles of 8 rows (exercises the grid and
    #    the v7x two-TC split heuristic).
    mu, log_var = encoder_forward(x, params, latent_dim)
    jax.block_until_ready((mu, log_var))

    mu_ref, logvar_ref = _reference(x, params, latent_dim)
    assert mu.shape == (batch, latent_dim) and log_var.shape == (batch, latent_dim)
    assert jnp.allclose(mu, mu_ref, atol=1e-4), "mu mismatch"
    assert jnp.allclose(log_var, logvar_ref, atol=1e-4), "log_var mismatch"

    # 2) Ragged last tile: batch=20 -> tb=16, 2 tiles, last tile has 4 valid
    #    rows (no wrapper-side padding; Pallas clips the OOB writes).
    x2 = jax.random.normal(kx2, (20, data_dim), jnp.float32)
    mu2, log_var2 = encoder_forward(x2, params, latent_dim)
    jax.block_until_ready((mu2, log_var2))
    mu2_ref, lv2_ref = _reference(x2, params, latent_dim)
    assert mu2.shape == (20, latent_dim) and log_var2.shape == (20, latent_dim)
    assert jnp.allclose(mu2, mu2_ref, atol=1e-4), "mu mismatch (ragged)"
    assert jnp.allclose(log_var2, lv2_ref, atol=1e-4), "log_var mismatch (ragged)"

    # TODO(synk): create_posterior (torch.distributions Independent/Normal) is
    # distribution bookkeeping, not a kernel; std = exp(0.5*log_var) can be
    # fused here later if needed.
    print("KERNEL_OK")
</pallas_src>

<mosaic_0001>
module attributes {stable_mosaic.version = 11 : i64} {
  func.func @_encoder_kernel(%arg0: i32, %arg1: memref<8x16xf32, #tpu.memory_space<vmem>>, %arg2: memref<16x32xbf16, #tpu.memory_space<vmem>>, %arg3: memref<1x32xf32, #tpu.memory_space<vmem>>, %arg4: memref<32x32xbf16, #tpu.memory_space<vmem>>, %arg5: memref<1x32xf32, #tpu.memory_space<vmem>>, %arg6: memref<32x128xbf16, #tpu.memory_space<vmem>>, %arg7: memref<1x128xf32, #tpu.memory_space<vmem>>, %arg8: memref<8x128xf32, #tpu.memory_space<vmem>>) attributes {dimension_semantics = [#tpu.dimension_semantics<parallel>], iteration_bounds = array<i64: 2>, scalar_prefetch = 0 : i64, scratch_operands = 0 : i64, tpu.core_type = #tpu.core_type<tc>, window_params = [{transform_indices = @transform_0, window_bounds = array<i64: 8, 16>}, {pipeline_mode = #tpu.pipeline_mode<synchronous>, transform_indices = @transform_1, window_bounds = array<i64: 16, 32>}, {pipeline_mode = #tpu.pipeline_mode<synchronous>, transform_indices = @transform_2, window_bounds = array<i64: 1, 32>}, {pipeline_mode = #tpu.pipeline_mode<synchronous>, transform_indices = @transform_3, window_bounds = array<i64: 32, 32>}, {pipeline_mode = #tpu.pipeline_mode<synchronous>, transform_indices = @transform_4, window_bounds = array<i64: 1, 32>}, {pipeline_mode = #tpu.pipeline_mode<synchronous>, transform_indices = @transform_5, window_bounds = array<i64: 32, 128>}, {pipeline_mode = #tpu.pipeline_mode<synchronous>, transform_indices = @transform_6, window_bounds = array<i64: 1, 128>}, {transform_indices = @transform_7, window_bounds = array<i64: 8, 128>}]} {
    %c0 = arith.constant 0 : index
    %c0_0 = arith.constant 0 : index
    %0 = vector.load %arg1[%c0, %c0_0] : memref<8x16xf32, #tpu.memory_space<vmem>>, vector<8x16xf32>
    %1 = arith.truncf %0 : vector<8x16xf32> to vector<8x16xbf16>
    %c0_1 = arith.constant 0 : index
    %c0_2 = arith.constant 0 : index
    %2 = vector.load %arg3[%c0_1, %c0_2] : memref<1x32xf32, #tpu.memory_space<vmem>>, vector<1x32xf32>
    %c0_3 = arith.constant 0 : index
    %c0_4 = arith.constant 0 : index
    %3 = vector.load %arg5[%c0_3, %c0_4] : memref<1x32xf32, #tpu.memory_space<vmem>>, vector<1x32xf32>
    %c0_5 = arith.constant 0 : index
    %c0_6 = arith.constant 0 : index
    %4 = vector.load %arg7[%c0_5, %c0_6] : memref<1x128xf32, #tpu.memory_space<vmem>>, vector<1x128xf32>
    %c0_7 = arith.constant 0 : index
    %c0_8 = arith.constant 0 : index
    %5 = vector.load %arg2[%c0_7, %c0_8] : memref<16x32xbf16, #tpu.memory_space<vmem>>, vector<16x32xbf16>
    %cst = arith.constant dense<0.000000e+00> : vector<8x32xf32>
    %6 = tpu.matmul %1, %5, %cst {dimension_numbers = #tpu.dot_dimension_numbers<[1], [0], [0], [1], [0, 0, 1, 1], [], []>} : vector<8x16xbf16>, vector<16x32xbf16>, vector<8x32xf32> -> vector<8x32xf32>
    %7 = vector.broadcast %2 : vector<1x32xf32> to vector<8x32xf32>
    %8 = arith.addf %6, %7 : vector<8x32xf32>
    %cst_9 = arith.constant 0.000000e+00 : f32
    %9 = vector.broadcast %cst_9 : f32 to vector<8x32xf32>
    %10 = arith.maximumf %8, %9 : vector<8x32xf32>
    %11 = arith.truncf %10 : vector<8x32xf32> to vector<8x32xbf16>
    %c0_10 = arith.constant 0 : index
    %c0_11 = arith.constant 0 : index
    %12 = vector.load %arg4[%c0_10, %c0_11] : memref<32x32xbf16, #tpu.memory_space<vmem>>, vector<32x32xbf16>
    %cst_12 = arith.constant dense<0.000000e+00> : vector<8x32xf32>
    %13 = tpu.matmul %11, %12, %cst_12 {dimension_numbers = #tpu.dot_dimension_numbers<[1], [0], [0], [1], [0, 0, 1, 1], [], []>} : vector<8x32xbf16>, vector<32x32xbf16>, vector<8x32xf32> -> vector<8x32xf32>
    %14 = vector.broadcast %3 : vector<1x32xf32> to vector<8x32xf32>
    %15 = arith.addf %13, %14 : vector<8x32xf32>
    %cst_13 = arith.constant 0.000000e+00 : f32
    %16 = vector.broadcast %cst_13 : f32 to vector<8x32xf32>
    %17 = arith.maximumf %15, %16 : vector<8x32xf32>
    %18 = arith.truncf %17 : vector<8x32xf32> to vector<8x32xbf16>
    %c0_14 = arith.constant 0 : index
    %c0_15 = arith.constant 0 : index
    %19 = vector.load %arg6[%c0_14, %c0_15] : memref<32x128xbf16, #tpu.memory_space<vmem>>, vector<32x128xbf16>
    %cst_16 = arith.constant dense<0.000000e+00> : vector<8x128xf32>
    %20 = tpu.matmul %18, %19, %cst_16 {dimension_numbers = #tpu.dot_dimension_numbers<[1], [0], [0], [1], [0, 0, 1, 1], [], []>} : vector<8x32xbf16>, vector<32x128xbf16>, vector<8x128xf32> -> vector<8x128xf32>
    %21 = vector.broadcast %4 : vector<1x128xf32> to vector<8x128xf32>
    %22 = arith.addf %20, %21 : vector<8x128xf32>
    %c0_17 = arith.constant 0 : index
    %c0_18 = arith.constant 0 : index
    %23 = vector.load %arg8[%c0_17, %c0_18] : memref<8x128xf32, #tpu.memory_space<vmem>>, vector<8x128xf32>
    tpu.vector_store %arg8[%c0_17, %c0_18], %22 {strides = array<i32>} : memref<8x128xf32, #tpu.memory_space<vmem>>, vector<8x128xf32>,
    return
  }
  func.func @transform_0(%arg0: i32) -> (i32, i32) {
    %c0_i32 = arith.constant 0 : i32
    %c0_i32_0 = arith.constant 0 : i32
    return %arg0, %c0_i32 : i32, i32
  }
  func.func @transform_1(%arg0: i32) -> (i32, i32) {
    %c0_i32 = arith.constant 0 : i32
    %c0_i32_0 = arith.constant 0 : i32
    %c0_i32_1 = arith.constant 0 : i32
    return %c0_i32, %c0_i32_0 : i32, i32
  }
  func.func @transform_2(%arg0: i32) -> (i32, i32) {
    %c0_i32 = arith.constant 0 : i32
    %c0_i32_0 = arith.constant 0 : i32
    %c0_i32_1 = arith.constant 0 : i32
    return %c0_i32, %c0_i32_0 : i32, i32
  }
  func.func @transform_3(%arg0: i32) -> (i32, i32) {
    %c0_i32 = arith.constant 0 : i32
    %c0_i32_0 = arith.constant 0 : i32
    %c0_i32_1 = arith.constant 0 : i32
    return %c0_i32, %c0_i32_0 : i32, i32
  }
  func.func @transform_4(%arg0: i32) -> (i32, i32) {
    %c0_i32 = arith.constant 0 : i32
    %c0_i32_0 = arith.constant 0 : i32
    %c0_i32_1 = arith.constant 0 : i32
    return %c0_i32, %c0_i32_0 : i32, i32
  }
  func.func @transform_5(%arg0: i32) -> (i32, i32) {
    %c0_i32 = arith.constant 0 : i32
    %c0_i32_0 = arith.constant 0 : i32
    %c0_i32_1 = arith.constant 0 : i32
    return %c0_i32, %c0_i32_0 : i32, i32
  }
  func.func @transform_6(%arg0: i32) -> (i32, i32) {
    %c0_i32 = arith.constant 0 : i32
    %c0_i32_0 = arith.constant 0 : i32
    %c0_i32_1 = arith.constant 0 : i32
    return %c0_i32, %c0_i32_0 : i32, i32
  }
  func.func @transform_7(%arg0: i32) -> (i32, i32) {
    %c0_i32 = arith.constant 0 : i32
    %c0_i32_0 = arith.constant 0 : i32
    return %arg0, %c0_i32 : i32, i32
  }
}

</mosaic_0001>

<llo_original>
// kernel: encoder_forward.1
$region0: #{encoder_forward.1}
  #allocation0 [shape = 'u32[]', space=smem, size = 0x4, offset = 0x4, fixed_abs, tag = 'smem constant byte address 0x4 - core index']
  #allocation1 [shape = 'u32[144,128]{1,0:T(1,128)}', space=vmem, size = 0x12000, scoped, tag = 'internal scratch']
  %s0 = inlined_call_operand.hbm [shape: f32[16,16], index: 0, kind: input, shape index: {}]
  %s1 = inlined_call_operand.hbm [shape: bf16[16,32], index: 1, kind: input, shape index: {}]
  %s2 = inlined_call_operand.vmem [shape: f32[1,32], index: 2, kind: input, shape index: {}]
  %s3 = inlined_call_operand.vmem [shape: bf16[32,32], index: 3, kind: input, shape index: {}]
  %s4 = inlined_call_operand.vmem [shape: f32[1,32], index: 4, kind: input, shape index: {}]
  %s5 = inlined_call_operand.hbm [shape: bf16[32,128], index: 5, kind: input, shape index: {}]
  %s6 = inlined_call_operand.hbm [shape: f32[1,128], index: 6, kind: input, shape index: {}]
  %s7 = inlined_call_operand.vmem [shape: f32[16,128], index: 7, kind: output, shape index: {}]
  %s8 = sld [smem:[#allocation0]]
  $region77: #{encoder_forward.1} parent=0
    _
  %s10 = ssub.s32 1, %s8
  %s11 = scalar_select 0, %s10, %s8
  $region1: #{encoder_forward.1} parent=0
    #allocation2 [shape = 'u8[8192]{0}', space=vmem, size = 0x2000, scoped, tag = 'input window, operand 0']
    #allocation3 [shape = 's32[2]{0}', space=sflag, size = 0x8, scoped, tag = 'scoped memory for encoder_forward.1']
    #allocation4 [shape = 'u8[4096]{0}', space=vmem, size = 0x1000, scoped, tag = 'input window, operand 1, single buffered']
    #allocation5 [shape = 's32[1]{0}', space=sflag, size = 0x4, scoped, tag = 'scoped memory for encoder_forward.1']
    #allocation6 [shape = 'u8[8192]{0}', space=vmem, size = 0x2000, scoped, tag = 'input window, operand 5, single buffered']
    #allocation7 [shape = 'u8[512]{0}', space=vmem, size = 0x400, scoped, tag = 'input window, operand 6, single buffered']
    #allocation8 [shape = 's32[1]{0}', space=sflag, size = 0x4, scoped, tag = 'scoped memory for encoder_forward.1']
    %12 = vsyncpa [#allocation3], 0
    %s13 = scalar_lea.sflag [#allocation3], 1
    %14 = vsyncpa %s13, 0
    %15 = vsyncpa [#allocation5], 0
    %16 = vsyncpa [#allocation8], 0
    loop: start=0, step=1, limit=4
    $region2: #{encoder_forward.1} parent=1 // loop_pre_header
      _
    $region3: #{encoder_forward.1} parent=1 // loop_header
      %s18 = sphi 0, %s22
      %p19 = scmp.ge.s32.totalorder %s18, 4
      %s28 = sphi 0, %s30
      %s31 = sphi 0, %s28
      %s32 = sphi 0, %s31
      %s48 = sphi 0, %s32
      %s52 = sphi 0, %s52
      %s54 = sphi 0, %s52
      %s55 = sphi 0, %s54
      %s69 = sphi 0, %s55
      %s73 = sphi 0, %s73
      %s75 = sphi 0, %s73
      %s76 = sphi 0, %s75
      %s90 = sphi 0, %s76
      %s94 = sphi 0, %s94
      %s96 = sphi 0, %s94
      %s97 = sphi 0, %s96
      %s111 = sphi 0, %s97
      %s115 = sphi 0, %s115
      %s117 = sphi 0, %s115
      %s118 = sphi 0, %s117
      %s132 = sphi 0, %s118
      %s136 = sphi 0, %s136
      %s138 = sphi 0, %s136
      %s139 = sphi 0, %s138
      %s153 = sphi 0, %s139
      %s157 = sphi 0, %s157
      %s159 = sphi 0, %s157
      %s160 = sphi 0, %s159
      %s174 = sphi 0, %s160
      %s180 = sphi 0, %s182
      %s183 = sphi 0, %s180
      %s184 = sphi 0, %s183
      %s200 = sphi 0, %s184
    $region4: #{encoder_forward.1} parent=1 // loop_header_branch
      %21 = sbr.rel (%p19) target = $region8
    $region5: #{encoder_forward.1} parent=1 // loop_body
      %s23 = ssub.s32 %s18, 1
      %s24 = ssub.s32 %s18, 2
      %s25 = sadd.s32 %s18, 1
      %s26 = ssub.s32 %s18, %s25
      %p27 = scmp.eq.s32.totalorder %s26, 0
      %s29 = sadd.s32 %s28, 1
      %s30 = scalar_select %p27, %s28, %s29
      %p33 = pneg %p27
      %p34 = scmp.eq.s32.totalorder %s18, 1
      %p35 = por %p33, %p34
      %p36 = scmp.ne.s32.totalorder %s28, %s31
      %p37 = scmp.eq.s32.totalorder %s18, 0
      %p38 = por %p36, %p37
      %p39 = scmp.ne.s32.totalorder %s28, %s31
      %p40 = scmp.eq.s32.totalorder %s23, 1
      %p41 = por %p39, %p40
      %p42 = scmp.ne.s32.totalorder %s31, %s32
      %p43 = scmp.eq.s32.totalorder %s23, 0
      %p44 = por %p42, %p43
      %p45 = scmp.ne.s32.totalorder %s31, %s32
      %p46 = scmp.eq.s32.totalorder %s24, 1
      %p47 = por %p45, %p46
      %p49 = scmp.ne.s32.totalorder %s32, %s48
      %p50 = scmp.eq.s32.totalorder %s24, 0
      %p51 = por %p49, %p50
      %s53 = sadd.s32 %s52, 1
      %p56 = scmp.eq.s32.totalorder %s18, 1
      %p57 = scmp.ne.s32.totalorder %s52, %s54
      %p58 = scmp.eq.s32.totalorder %s18, 0
      %p59 = por %p57, %p58
      %p60 = scmp.ne.s32.totalorder %s52, %s54
      %p61 = scmp.eq.s32.totalorder %s23, 1
      %p62 = por %p60, %p61
      %p63 = scmp.ne.s32.totalorder %s54, %s55
      %p64 = scmp.eq.s32.totalorder %s23, 0
      %p65 = por %p63, %p64
      %p66 = scmp.ne.s32.totalorder %s54, %s55
      %p67 = scmp.eq.s32.totalorder %s24, 1
      %p68 = por %p66, %p67
      %p70 = scmp.ne.s32.totalorder %s55, %s69
      %p71 = scmp.eq.s32.totalorder %s24, 0
      %p72 = por %p70, %p71
      %s74 = sadd.s32 %s73, 1
      %p77 = scmp.eq.s32.totalorder %s18, 1
      %p78 = scmp.ne.s32.totalorder %s73, %s75
      %p79 = scmp.eq.s32.totalorder %s18, 0
      %p80 = por %p78, %p79
      %p81 = scmp.ne.s32.totalorder %s73, %s75
      %p82 = scmp.eq.s32.totalorder %s23, 1
      %p83 = por %p81, %p82
      %p84 = scmp.ne.s32.totalorder %s75, %s76
      %p85 = scmp.eq.s32.totalorder %s23, 0
      %p86 = por %p84, %p85
      %p87 = scmp.ne.s32.totalorder %s75, %s76
      %p88 = scmp.eq.s32.totalorder %s24, 1
      %p89 = por %p87, %p88
      %p91 = scmp.ne.s32.totalorder %s76, %s90
      %p92 = scmp.eq.s32.totalorder %s24, 0
      %p93 = por %p91, %p92
      %s95 = sadd.s32 %s94, 1
      %p98 = scmp.eq.s32.totalorder %s18, 1
      %p99 = scmp.ne.s32.totalorder %s94, %s96
      %p100 = scmp.eq.s32.totalorder %s18, 0
      %p101 = por %p99, %p100
      %p102 = scmp.ne.s32.totalorder %s94, %s96
      %p103 = scmp.eq.s32.totalorder %s23, 1
      %p104 = por %p102, %p103
      %p105 = scmp.ne.s32.totalorder %s96, %s97
      %p106 = scmp.eq.s32.totalorder %s23, 0
      %p107 = por %p105, %p106
      %p108 = scmp.ne.s32.totalorder %s96, %s97
      %p109 = scmp.eq.s32.totalorder %s24, 1
      %p110 = por %p108, %p109
      %p112 = scmp.ne.s32.totalorder %s97, %s111
      %p113 = scmp.eq.s32.totalorder %s24, 0
      %p114 = por %p112, %p113
      %s116 = sadd.s32 %s115, 1
      %p119 = scmp.eq.s32.totalorder %s18, 1
      %p120 = scmp.ne.s32.totalorder %s115, %s117
      %p121 = scmp.eq.s32.totalorder %s18, 0
      %p122 = por %p120, %p121
      %p123 = scmp.ne.s32.totalorder %s115, %s117
      %p124 = scmp.eq.s32.totalorder %s23, 1
      %p125 = por %p123, %p124
      %p126 = scmp.ne.s32.totalorder %s117, %s118
      %p127 = scmp.eq.s32.totalorder %s23, 0
      %p128 = por %p126, %p127
      %p129 = scmp.ne.s32.totalorder %s117, %s118
      %p130 = scmp.eq.s32.totalorder %s24, 1
      %p131 = por %p129, %p130
      %p133 = scmp.ne.s32.totalorder %s118, %s132
      %p134 = scmp.eq.s32.totalorder %s24, 0
      %p135 = por %p133, %p134
      %s137 = sadd.s32 %s136, 1
      %p140 = scmp.eq.s32.totalorder %s18, 1
      %p141 = scmp.ne.s32.totalorder %s136, %s138
      %p142 = scmp.eq.s32.totalorder %s18, 0
      %p143 = por %p141, %p142
      %p144 = scmp.ne.s32.totalorder %s136, %s138
      %p145 = scmp.eq.s32.totalorder %s23, 1
      %p146 = por %p144, %p145
      %p147 = scmp.ne.s32.totalorder %s138, %s139
      %p148 = scmp.eq.s32.totalorder %s23, 0
      %p149 = por %p147, %p148
      %p150 = scmp.ne.s32.totalorder %s138, %s139
      %p151 = scmp.eq.s32.totalorder %s24, 1
      %p152 = por %p150, %p151
      %p154 = scmp.ne.s32.totalorder %s139, %s153
      %p155 = scmp.eq.s32.totalorder %s24, 0
      %p156 = por %p154, %p155
      %s158 = sadd.s32 %s157, 1
      %p161 = scmp.eq.s32.totalorder %s18, 1
      %p162 = scmp.ne.s32.totalorder %s157, %s159
      %p163 = scmp.eq.s32.totalorder %s18, 0
      %p164 = por %p162, %p163
      %p165 = scmp.ne.s32.totalorder %s157, %s159
      %p166 = scmp.eq.s32.totalorder %s23, 1
      %p167 = por %p165, %p166
      %p168 = scmp.ne.s32.totalorder %s159, %s160
      %p169 = scmp.eq.s32.totalorder %s23, 0
      %p170 = por %p168, %p169
      %p171 = scmp.ne.s32.totalorder %s159, %s160
      %p172 = scmp.eq.s32.totalorder %s24, 1
      %p173 = por %p171, %p172
      %p175 = scmp.ne.s32.totalorder %s160, %s174
      %p176 = scmp.eq.s32.totalorder %s24, 0
      %p177 = por %p175, %p176
      %s178 = ssub.s32 %s18, %s25
      %p179 = scmp.eq.s32.totalorder %s178, 0
      %s181 = sadd.s32 %s180, 1
      %s182 = scalar_select %p179, %s180, %s181
      %p185 = pneg %p179
      %p186 = scmp.eq.s32.totalorder %s18, 1
      %p187 = por %p185, %p186
      %p188 = scmp.ne.s32.totalorder %s180, %s183
      %p189 = scmp.eq.s32.totalorder %s18, 0
      %p190 = por %p188, %p189
      %p191 = scmp.ne.s32.totalorder %s180, %s183
      %p192 = scmp.eq.s32.totalorder %s23, 1
      %p193 = por %p191, %p192
      %p194 = scmp.ne.s32.totalorder %s183, %s184
      %p195 = scmp.eq.s32.totalorder %s23, 0
      %p196 = por %p194, %p195
      %p197 = scmp.ne.s32.totalorder %s183, %s184
      %p198 = scmp.eq.s32.totalorder %s24, 1
      %p199 = por %p197, %p198
      %p201 = scmp.ne.s32.totalorder %s184, %s200
      %p202 = scmp.eq.s32.totalorder %s24, 0
      %p203 = por %p201, %p202
      %p204 = scmp.le.s32.totalorder 1, %s18
      %p205 = scmp.lt.s32.totalorder %s18, 3
      %p206 = pnand %p204, %p205
      %p207 = pneg %p206
      // Predicated region
      $region9: #{encoder_forward.1} parent=5 // pred_check
        _
      $region10: #{encoder_forward.1} parent=5 // pred_check_branch
        %209 = sbr.rel (%p206) target = $region12
      $region11: #{encoder_forward.1} parent=5 // pred_region
        %s210 = ssub.s32 %s18, 1
        // Predicated region
        $region13: #{encoder_forward.1} parent=11 // pred_check
          %p211 = pneg %p65
        $region14: #{encoder_forward.1} parent=11 // pred_check_branch
          %213 = sbr.rel (%p211) target = $region16
        $region15: #{encoder_forward.1} parent=11 // pred_region
          %s215 = ssub.s32 128, 128
          %216 = vsyncadd [#allocation5], %s215
          %s217 = sshll.u32 [#allocation4], 4
          %s218 = int_to_ptr.vmem [resolvable:$true] %s217
          %223 = dma.hbm_to_vmem [thread:$0]  %s1, 128, %s218, [#allocation5], 64, 64, 4
        $region16: #{encoder_forward.1} parent=11 // pred_fallthru
          _
        // Predicated region
        $region17: #{encoder_forward.1} parent=11 // pred_check
          %p224 = pneg %p86
        $region18: #{encoder_forward.1} parent=11 // pred_check_branch
          %226 = sbr.rel (%p224) target = $region20
        $region19: #{encoder_forward.1} parent=11 // pred_region
          _
        $region20: #{encoder_forward.1} parent=11 // pred_fallthru
          _
        // Predicated region
        $region21: #{encoder_forward.1} parent=11 // pred_check
          %p227 = pneg %p107
        $region22: #{encoder_forward.1} parent=11 // pred_check_branch
          %229 = sbr.rel (%p227) target = $region24
        $region23: #{encoder_forward.1} parent=11 // pred_region
          _
        $region24: #{encoder_forward.1} parent=11 // pred_fallthru
          _
        // Predicated region
        $region25: #{encoder_forward.1} parent=11 // pred_check
          %p230 = pneg %p128
        $region26: #{encoder_forward.1} parent=11 // pred_check_branch
          %232 = sbr.rel (%p230) target = $region28
        $region27: #{encoder_forward.1} parent=11 // pred_region
          _
        $region28: #{encoder_forward.1} parent=11 // pred_fallthru
          _
        // Predicated region
        $region29: #{encoder_forward.1} parent=11 // pred_check
          %p233 = pneg %p149
        $region30: #{encoder_forward.1} parent=11 // pred_check_branch
          %235 = sbr.rel (%p233) target = $region32
        $region31: #{encoder_forward.1} parent=11 // pred_region
          %s237 = ssub.s32 256, 256
          %238 = vsyncadd [#allocation5], %s237
          %s239 = sshll.u32 [#allocation6], 4
          %s240 = int_to_ptr.vmem [resolvable:$true] %s239
          %245 = dma.hbm_to_vmem [thread:$0]  %s5, 256, %s240, [#allocation5], 64, 64, 4
        $region32: #{encoder_forward.1} parent=11 // pred_fallthru
          _
        // Predicated region
        $region33: #{encoder_forward.1} parent=11 // pred_check
          %p246 = pneg %p170
        $region34: #{encoder_forward.1} parent=11 // pred_check_branch
          %248 = sbr.rel (%p246) target = $region36
        $region35: #{encoder_forward.1} parent=11 // pred_region
          %s250 = ssub.s32 16, 16
          %251 = vsyncadd [#allocation8], %s250
          %s253 = sshll.u32 [#allocation7], 4
          %s254 = int_to_ptr.vmem [resolvable:$true] %s253
          %256 = dma.hbm_to_vmem [thread:$0]  %s6, 16, %s254, [#allocation8]
        $region36: #{encoder_forward.1} parent=11 // pred_fallthru
          _
      $region12: #{encoder_forward.1} parent=5 // pred_fallthru
        _
      %p257 = scmp.lt.s32.totalorder %s18, 2
      // Predicated region
      $region37: #{encoder_forward.1} parent=5 // pred_check
        %p258 = pneg %p257
      $region38: #{encoder_forward.1} parent=5 // pred_check_branch
        %260 = sbr.rel (%p258) target = $region40
      $region39: #{encoder_forward.1} parent=5 // pred_region
        // Predicated region
        $region41: #{encoder_forward.1} parent=39 // pred_check
          %p261 = pneg %p38
        $region42: #{encoder_forward.1} parent=39 // pred_check_branch
          %263 = sbr.rel (%p261) target = $region44
        $region43: #{encoder_forward.1} parent=39 // pred_region
          %s264 = sand.u32 %s28, 1
          %s265 = scalar_lea.sflag [#allocation3], %s264
          %s266 = sand.u32 %s28, 1
          %s267 = smul.addr %s266, 8
          %s268 = scalar_lea.vmem [#allocation2], %s267
          %s270 = ssub.s32 128, 128
          %271 = vsyncadd %s265, %s270
          %s272 = smul.addr %s18, 128
          %s273 = scalar_lea.hbm %s0, %s272
          %s275 = sshll.u32 %s268, 4
          %s276 = int_to_ptr.vmem [resolvable:$true] %s275
          %278 = dma.hbm_to_vmem [thread:$0]  %s273, 128, %s276, %s265
        $region44: #{encoder_forward.1} parent=39 // pred_fallthru
          _
      $region40: #{encoder_forward.1} parent=5 // pred_fallthru
        _
      %p279 = scmp.le.s32.totalorder 1, %s18
      %p280 = scmp.lt.s32.totalorder %s18, 3
      %p281 = pnand %p279, %p280
      %p282 = pneg %p281
      // Predicated region
      $region45: #{encoder_forward.1} parent=5 // pred_check
        _
      $region46: #{encoder_forward.1} parent=5 // pred_check_branch
        %284 = sbr.rel (%p281) target = $region48
      $region47: #{encoder_forward.1} parent=5 // pred_region
        %s285 = ssub.s32 %s18, 1
        %s286 = sand.u32 %s31, 1
        %s287 = scalar_lea.sflag [#allocation3], %s286
        %s288 = sand.u32 %s31, 1
        %s289 = smul.addr %s288, 8
        %s290 = scalar_lea.vmem [#allocation2], %s289
        // Predicated region
        $region49: #{encoder_forward.1} parent=47 // pred_check
          %p291 = pneg %p44
        $region50: #{encoder_forward.1} parent=47 // pred_check_branch
          %293 = sbr.rel (%p291) target = $region52
        $region51: #{encoder_forward.1} parent=47 // pred_region
          %294 = dma.done %s287, 128
        $region52: #{encoder_forward.1} parent=47 // pred_fallthru
          _
        // Predicated region
        $region53: #{encoder_forward.1} parent=47 // pred_check
          %p295 = pneg %p65
        $region54: #{encoder_forward.1} parent=47 // pred_check_branch
          %297 = sbr.rel (%p295) target = $region56
        $region55: #{encoder_forward.1} parent=47 // pred_region
          %298 = dma.done [#allocation5], 128
        $region56: #{encoder_forward.1} parent=47 // pred_fallthru
          _
        // Predicated region
        $region57: #{encoder_forward.1} parent=47 // pred_check
          %p299 = pneg %p149
        $region58: #{encoder_forward.1} parent=47 // pred_check_branch
          %301 = sbr.rel (%p299) target = $region60
        $region59: #{encoder_forward.1} parent=47 // pred_region
          %302 = dma.done [#allocation5], 256
        $region60: #{encoder_forward.1} parent=47 // pred_fallthru
          _
        // Predicated region
        $region61: #{encoder_forward.1} parent=47 // pred_check
          %p303 = pneg %p170
        $region62: #{encoder_forward.1} parent=47 // pred_check_branch
          %305 = sbr.rel (%p303) target = $region64
        $region63: #{encoder_forward.1} parent=47 // pred_region
          %306 = dma.done [#allocation8], 16
        $region64: #{encoder_forward.1} parent=47 // pred_fallthru
          _
        %s307 = sand.u32 %s31, 1
        %s308 = scalar_lea.sflag [#allocation3], %s307
        %s309 = sand.u32 %s31, 1
        %s310 = smul.addr %s309, 8
        %s311 = scalar_lea.vmem [#allocation2], %s310
        %p312 = pneg %p44
        %p313 = pneg %p41
        %p314 = pneg %p65
        %p315 = pneg %p62
        %p316 = pneg %p86
        %p317 = pneg %p83
        %p318 = pneg %p107
        %p319 = pneg %p104
        %p320 = pneg %p128
        %p321 = pneg %p125
        %p322 = pneg %p149
        %p323 = pneg %p146
        %p324 = pneg %p170
        %p325 = pneg %p167
        %p326 = pneg %p196
        %p327 = pneg %p193
        %p328 = scmp.lt.s32.totalorder %s23, 1
        %s329 = scalar_select %p328, %s23, 1
        %s330 = smul.addr %s329, 8
        %s331 = scalar_lea.vmem %s7, %s330
        %p332 = scmp.lt.s32.totalorder %s23, 1
        %s333 = scalar_select %p332, %s23, 1
        %s334 = smul.addr %s333, 8
        %s335 = scalar_lea.vmem %s7, %s334
        %v337 = vld [vmem:[%s290] sm:$0xff]
        %v338 = vpack.c.bf16 %v337, %v337
        %v339 = vld [vmem:[%s2] sm:$0x1]
        %v340 = vld [vmem:[%s4] sm:$0x1]
        %v341 = vld [vmem:[#allocation7] sm:$0x1]
        %v342 = vld [vmem:[#allocation4] sm:$0xf]
        %v343 = vld [vmem:[#allocation4 + $0x4] sm:$0xf]
        %v345 = vlaneseq
        %v346 = vshrl.u32 %v345, 7
        %v347 = vsub.s32 0, %v346
        %v348 = vrot.slane %v339, %v347
        %v352 = vunpack.c.l.b16 %v342
        %v353 = vunpack.c.l.b16 %v343
        %v354 = vpack.c.b16 %v353, %v352
        %vm356 = vcmask 130048
        %v358 = vsel %vm356, %v338, 0
        %360 = vmatprep.subr.bf16.mxu0 0
        %361 = vmatpush1.bf16.msra.mxu0 %v354
        %362 = vmatprep.subr.bf16.mxu0 0
        %363 = vmatpush1.bf16.msra.mxu0 0
        %364 = vmatprep.subr.bf16.mxu0 0
        %365 = vmatpush1.bf16.msra.mxu0 0
        %366 = vmatprep.subr.bf16.mxu0 0
        %367 = vmatpush1.bf16.msra.mxu0 0
        %368 = vmatprep.subr.bf16.mxu0 0
        %369 = vmatpush1.bf16.msra.mxu0 0
        %370 = vmatprep.subr.bf16.mxu0 0
        %371 = vmatpush1.bf16.msra.mxu0 0
        %372 = vmatprep.subr.bf16.mxu0 0
        %373 = vmatpush1.bf16.msra.mxu0 0
        %374 = vmatprep.subr.bf16.mxu0 0
        %375 = vmatpush1.bf16.msra.mxu0 0
        %376 = vmatprep.subr.bf16.mxu0 0
        %377 = vmatpush1.bf16.msra.mxu0 0
        %378 = vmatprep.subr.bf16.mxu0 0
        %379 = vmatpush1.bf16.msra.mxu0 0
        %380 = vmatprep.subr.bf16.mxu0 0
        %381 = vmatpush1.bf16.msra.mxu0 0
        %382 = vmatprep.subr.bf16.mxu0 0
        %383 = vmatpush1.bf16.msra.mxu0 0
        %384 = vmatprep.subr.bf16.mxu0 0
        %385 = vmatpush1.bf16.msra.mxu0 0
        %386 = vmatprep.subr.bf16.mxu0 0
        %387 = vmatpush1.bf16.msra.mxu0 0
        %388 = vmatprep.subr.bf16.mxu0 0
        %389 = vmatpush1.bf16.msra.mxu0 0
        %390 = vmatprep.subr.bf16.mxu0 0
        %391 = vmatpush1.bf16.msra.mxu0 0
        %392 = vmatprep.mubr.bf16.mxu0 0
        %393 = vmatmul.mubr.bf16.gmra.mrb[0].mxu0 %v358
        %v394 = vpop.f32.mrb[0].mxu0
        %v395 = vadd.f32 %v348, %v394
        %v396 = vpop.f32.mrb[0].mxu0
        %v397 = vpop.f32.mrb[0].mxu0
        %v398 = vpop.f32.mrb[0].mxu0
        %399 = vdwg.mxu0
        %v400 = vmax.f32 %v395, 0.0
        %v401 = vpack.c.bf16 %v400, %v400
        %v402 = vld [vmem:[%s3] sm:$0xf]
        %v403 = vld [vmem:[%s3 + $0x4] sm:$0xf]
        %v404 = vld [vmem:[%s3 + $0x8] sm:$0xf]
        %v405 = vld [vmem:[%s3 + $0xc] sm:$0xf]
        %v407 = vlaneseq
        %v408 = vshrl.u32 %v407, 7
        %v409 = vsub.s32 0, %v408
        %v410 = vrot.slane %v340, %v409
        %v416 = vunpack.c.l.b16 %v402
        %v417 = vunpack.c.l.b16 %v403
        %v418 = vunpack.c.l.b16 %v404
        %v419 = vunpack.c.l.b16 %v405
        %v420 = vpack.c.b16 %v417, %v416
        %v421 = vpack.c.b16 %v419, %v418
        %vm424 = vcmask 261120
        %v426 = vsel %vm424, %v401, 0
        %428 = vmatprep.subr.bf16.mxu0 0
        %429 = vmatpush1.bf16.msra.mxu0 %v420
        %430 = vmatprep.subr.bf16.mxu0 0
        %431 = vmatpush1.bf16.msra.mxu0 %v421
        %432 = vmatprep.subr.bf16.mxu0 0
        %433 = vmatpush1.bf16.msra.mxu0 0
        %434 = vmatprep.subr.bf16.mxu0 0
        %435 = vmatpush1.bf16.msra.mxu0 0
        %436 = vmatprep.subr.bf16.mxu0 0
        %437 = vmatpush1.bf16.msra.mxu0 0
        %438 = vmatprep.subr.bf16.mxu0 0
        %439 = vmatpush1.bf16.msra.mxu0 0
        %440 = vmatprep.subr.bf16.mxu0 0
        %441 = vmatpush1.bf16.msra.mxu0 0
        %442 = vmatprep.subr.bf16.mxu0 0
        %443 = vmatpush1.bf16.msra.mxu0 0
        %444 = vmatprep.subr.bf16.mxu0 0
        %445 = vmatpush1.bf16.msra.mxu0 0
        %446 = vmatprep.subr.bf16.mxu0 0
        %447 = vmatpush1.bf16.msra.mxu0 0
        %448 = vmatprep.subr.bf16.mxu0 0
        %449 = vmatpush1.bf16.msra.mxu0 0
        %450 = vmatprep.subr.bf16.mxu0 0
        %451 = vmatpush1.bf16.msra.mxu0 0
        %452 = vmatprep.subr.bf16.mxu0 0
        %453 = vmatpush1.bf16.msra.mxu0 0
        %454 = vmatprep.subr.bf16.mxu0 0
        %455 = vmatpush1.bf16.msra.mxu0 0
        %456 = vmatprep.subr.bf16.mxu0 0
        %457 = vmatpush1.bf16.msra.mxu0 0
        %458 = vmatprep.subr.bf16.mxu0 0
        %459 = vmatpush1.bf16.msra.mxu0 0
        %460 = vmatprep.mubr.bf16.mxu0 0
        %461 = vmatmul.mubr.bf16.gmra.mrb[0].mxu0 %v426
        %v462 = vpop.f32.mrb[0].mxu0
        %v463 = vadd.f32 %v410, %v462
        %v464 = vpop.f32.mrb[0].mxu0
        %v465 = vpop.f32.mrb[0].mxu0
        %v466 = vpop.f32.mrb[0].mxu0
        %467 = vdwg.mxu0
        %v468 = vmax.f32 %v463, 0.0
        %v469 = vpack.c.bf16 %v468, %v468
        %v470 = vld [vmem:[#allocation6] sm:$0xf]
        %v471 = vld [vmem:[#allocation6 + $0x4] sm:$0xf]
        %v472 = vld [vmem:[#allocation6 + $0x8] sm:$0xf]
        %v473 = vld [vmem:[#allocation6 + $0xc] sm:$0xf]
        %v475 = vlaneseq
        %v476 = vshrl.u32 %v475, 7
        %v477 = vsub.s32 0, %v476
        %v478 = vrot.slane %v341, %v477
        %v484 = vunpack.c.l.b16 %v470
        %v485 = vunpack.c.l.b16 %v471
        %v486 = vunpack.c.l.b16 %v472
        %v487 = vunpack.c.l.b16 %v473
        %v488 = vpack.c.b16 %v485, %v484
        %v489 = vpack.c.b16 %v487, %v486
        %v493 = vsel %vm424, %v469, 0
        %495 = vmatprep.subr.bf16.mxu0 0
        %496 = vmatpush1.bf16.msra.mxu0 %v488
        %497 = vmatprep.subr.bf16.mxu0 0
        %498 = vmatpush1.bf16.msra.mxu0 %v489
        %499 = vmatprep.subr.bf16.mxu0 0
        %500 = vmatpush1.bf16.msra.mxu0 0
        %501 = vmatprep.subr.bf16.mxu0 0
        %502 = vmatpush1.bf16.msra.mxu0 0
        %503 = vmatprep.subr.bf16.mxu0 0
        %504 = vmatpush1.bf16.msra.mxu0 0
        %505 = vmatprep.subr.bf16.mxu0 0
        %506 = vmatpush1.bf16.msra.mxu0 0
        %507 = vmatprep.subr.bf16.mxu0 0
        %508 = vmatpush1.bf16.msra.mxu0 0
        %509 = vmatprep.subr.bf16.mxu0 0
        %510 = vmatpush1.bf16.msra.mxu0 0
        %511 = vmatprep.subr.bf16.mxu0 0
        %512 = vmatpush1.bf16.msra.mxu0 0
        %513 = vmatprep.subr.bf16.mxu0 0
        %514 = vmatpush1.bf16.msra.mxu0 0
        %515 = vmatprep.subr.bf16.mxu0 0
        %516 = vmatpush1.bf16.msra.mxu0 0
        %517 = vmatprep.subr.bf16.mxu0 0
        %518 = vmatpush1.bf16.msra.mxu0 0
        %519 = vmatprep.subr.bf16.mxu0 0
        %520 = vmatpush1.bf16.msra.mxu0 0
        %521 = vmatprep.subr.bf16.mxu0 0
        %522 = vmatpush1.bf16.msra.mxu0 0
        %523 = vmatprep.subr.bf16.mxu0 0
        %524 = vmatpush1.bf16.msra.mxu0 0
        %525 = vmatprep.subr.bf16.mxu0 0
        %526 = vmatpush1.bf16.msra.mxu0 0
        %527 = vmatprep.mubr.bf16.mxu0 0
        %528 = vmatmul.mubr.bf16.gmra.mrb[0].mxu0 %v493
        %v529 = vpop.f32.mrb[0].mxu0
        %v530 = vadd.f32 %v478, %v529
        %v531 = vpop.f32.mrb[0].mxu0
        %v532 = vpop.f32.mrb[0].mxu0
        %v533 = vpop.f32.mrb[0].mxu0
        %534 = vdwg.mxu0
        %535 = vst [vmem:[%s335] sm:$0xff] %v530
        %p536 = scmp.lt.s32.totalorder %s23, 1
        %s537 = scalar_select %p536, %s23, 1
        %s538 = smul.addr %s537, 8
        %s539 = scalar_lea.vmem %s7, %s538
        // Predicated region
        $region65: #{encoder_forward.1} parent=47 // pred_check
          %p540 = pneg %p193
        $region66: #{encoder_forward.1} parent=47 // pred_check_branch
          %542 = sbr.rel (%p540) target = $region68
        $region67: #{encoder_forward.1} parent=47 // pred_region
          _
        $region68: #{encoder_forward.1} parent=47 // pred_fallthru
          _
      $region48: #{encoder_forward.1} parent=5 // pred_fallthru
        _
      %p543 = scmp.le.s32.totalorder 2, %s18
      // Predicated region
      $region69: #{encoder_forward.1} parent=5 // pred_check
        %p544 = pneg %p543
      $region70: #{encoder_forward.1} parent=5 // pred_check_branch
        %546 = sbr.rel (%p544) target = $region72
      $region71: #{encoder_forward.1} parent=5 // pred_region
        %s547 = ssub.s32 %s18, 2
        // Predicated region
        $region73: #{encoder_forward.1} parent=71 // pred_check
          %p548 = pneg %p199
        $region74: #{encoder_forward.1} parent=71 // pred_check_branch
          %550 = sbr.rel (%p548) target = $region76
        $region75: #{encoder_forward.1} parent=71 // pred_region
          %p551 = scmp.lt.s32.totalorder %s24, 1
          %s552 = scalar_select %p551, %s24, 1
          %s553 = smul.addr %s552, 8
          %s554 = scalar_lea.vmem %s7, %s553
        $region76: #{encoder_forward.1} parent=71 // pred_fallthru
          _
      $region72: #{encoder_forward.1} parent=5 // pred_fallthru
        _
    $region6: #{encoder_forward.1} parent=1 // loop_footer
      %s22 = sadd.s32 1, %s18
    $region7: #{encoder_forward.1} parent=1 // loop_footer_branch
      %17 = sbr.rel target = $region3
    $region8: #{encoder_forward.1} parent=1 // loop_exit
      _
    %555 = vsyncpa [#allocation3], 1
    %s556 = scalar_lea.sflag [#allocation3], 1
    %557 = vsyncpa %s556, 1
    %558 = vsyncpa [#allocation5], 1
    %559 = vsyncpa [#allocation8], 1

</llo_original>
